<compile_context>
chip_gen: v6e
topology: v6e:2x2x1
jax: 0.10.0
libtpu: 0.0.40
codegen_flags: <defaults>
</compile_context>

<pallas_src>
import jax
import jax.numpy as jnp
from jax.experimental import pallas as pl
from jax.experimental.pallas import tpu as pltpu

_EPS = 1e-5


def _ceil_div(a, b):
    return -(-a // b)


def _round_up(a, b):
    return _ceil_div(a, b) * b


def _sublane_pack(itemsize):
    # f32 -> 8, bf16 -> 16, int8/fp8 -> 32 rows per sublane-packed tile.
    return 8 * max(1, 4 // max(int(itemsize), 1))


def _layernorm_kernel(x_ref, gamma_ref, beta_ref, o_ref):
    # x_ref / o_ref: (Bt, C, tile_s) -- C on sublanes, spatial on lanes.
    # gamma_ref / beta_ref: (1, C, 1), already f32 -- broadcast over lanes/batch.
    x = x_ref[...].astype(jnp.float32)
    # Single fused pass over the channel (sublane) axis: mean and mean-of-squares.
    mean = jnp.mean(x, axis=1, keepdims=True)                 # (Bt, 1, tile_s)
    mean_sq = jnp.mean(x * x, axis=1, keepdims=True)          # (Bt, 1, tile_s)
    var = jnp.maximum(mean_sq - mean * mean, 0.0)             # biased var == torch LN
    inv = jax.lax.rsqrt(var + _EPS)
    o_ref[...] = ((x - mean) * inv * gamma_ref[...] + beta_ref[...]).astype(o_ref.dtype)


def _pick_tiles(B, C, S, itemsize, *, vmem_budget_bytes=6 << 20, min_grid_steps=8):
    """Choose (Bt, tile_s) block dims.

    Accounts for sublane padding of C and the in-kernel f32 temporaries, keeps
    the double-buffered working set around a few MiB (kernel is HBM-bound, big
    tiles buy nothing), and makes sure the grid has enough steps for v7x's two
    TensorCores and the software pipeline.
    """
    itemsize = int(itemsize)
    c_pad = _round_up(C, _sublane_pack(itemsize))   # VMEM tiles are sublane-padded
    c_pad32 = _round_up(C, 8)                       # f32 temporaries pad to 8
    # Per spatial column: double-buffered in + out (input dtype) plus ~3
    # tile-sized f32 compiler temporaries (upcast / squares / normalized).
    bytes_per_col = 4 * c_pad * itemsize + 3 * c_pad32 * 4

    if S < 128:
        # Small feature maps (e.g. 7x7/8x8): output last dim is sub-lane-width,
        # per-step overhead dominates -> batch images per grid step.
        # TODO(synk): lane density itself is unrecoverable here without a transpose.
        bytes_per_img = bytes_per_col * S
        bt = max(1, min(B, vmem_budget_bytes // bytes_per_img))
        desired_steps = min(B, 4)                   # keep a few steps for v7x's 2 TCs
        if desired_steps > 1:
            bt = min(bt, _ceil_div(B, desired_steps))
        return max(1, bt), S

    max_cols = max(1, vmem_budget_bytes // bytes_per_col)
    if max_cols >= S:
        tile = S                                    # whole spatial row fits
    elif max_cols >= 128:
        tile = (max_cols // 128) * 128              # lane-dense and within budget
    else:
        # Very large C: the (8,128) layout forces at least a 128-lane tile when
        # splitting S; accept the minimal lane-dense tile.
        tile = 128

    # Enough grid steps: B * ceil(S/tile) >= min_grid_steps when possible.
    need = _ceil_div(min_grid_steps, max(B, 1))
    if need > 1:
        target = max(128, _round_up(_ceil_div(S, need), 128))
        tile = min(tile, target)
    return 1, tile


def _vmem_limit_bytes(bt, C, tile_s, itemsize):
    itemsize = int(itemsize)
    c_pad = _round_up(C, _sublane_pack(itemsize))
    c_pad32 = _round_up(C, 8)
    io = 4 * bt * c_pad * tile_s * itemsize         # double-buffered in + out
    scratch = 3 * bt * c_pad32 * tile_s * 4         # f32 in-kernel temporaries
    limit = io + scratch + (4 << 20)                # params + headroom
    # Within the scoped default on v6e and well clear of v7x's 64 MiB physical.
    return int(min(max(limit, 16 << 20), 32 << 20))


def _my_layer_norm_impl(x_nchw, gamma, beta):
    """LayerNorm over channels of an NCHW tensor (== myLayerNorm.forward)."""
    B, C, H, W = x_nchw.shape
    S = H * W

    # Metadata-only under jit (HW are the trailing contiguous dims).
    x_bcs = x_nchw.reshape(B, C, S)
    gamma3 = gamma.astype(jnp.float32).reshape(1, C, 1)
    beta3 = beta.astype(jnp.float32).reshape(1, C, 1)

    bt, tile_s = _pick_tiles(B, C, S, x_nchw.dtype.itemsize)
    grid = (pl.cdiv(B, bt), pl.cdiv(S, tile_s))

    out_bcs = pl.pallas_call(
        _layernorm_kernel,
        out_shape=jax.ShapeDtypeStruct((B, C, S), x_nchw.dtype),
        grid=grid,
        in_specs=[
            pl.BlockSpec((bt, C, tile_s), lambda b, s: (b, 0, s)),
            pl.BlockSpec((1, C, 1), lambda b, s: (0, 0, 0)),
            pl.BlockSpec((1, C, 1), lambda b, s: (0, 0, 0)),
        ],
        out_specs=pl.BlockSpec((bt, C, tile_s), lambda b, s: (b, 0, s)),
        compiler_params=pltpu.CompilerParams(
            dimension_semantics=("parallel", "parallel"),
            vmem_limit_bytes=_vmem_limit_bytes(bt, C, tile_s, x_nchw.dtype.itemsize),
        ),
    )(x_bcs, gamma3, beta3)

    # Metadata-only reshape back to NCHW.
    return out_bcs.reshape(B, C, H, W)


# Jit the wrapper so the reshapes are bitcasts, not extra HBM passes.
my_layer_norm = jax.jit(_my_layer_norm_impl)


def _reference(x_nchw, gamma, beta, eps=_EPS):
    x = jnp.transpose(x_nchw, (0, 2, 3, 1)).astype(jnp.float32)
    mean = jnp.mean(x, axis=-1, keepdims=True)
    var = jnp.mean((x - mean) ** 2, axis=-1, keepdims=True)
    y = (x - mean) / jnp.sqrt(var + eps) * gamma + beta
    return jnp.transpose(y, (0, 3, 1, 2)).astype(x_nchw.dtype)


if __name__ == "__main__":
    key = jax.random.PRNGKey(0)
    kx, kg, kb = jax.random.split(key, 3)

    # Main check: B=2, C=4, 16x16 feature map (S=256, lane-dense path).
    B, C, H, W = 2, 4, 16, 16
    x = jax.random.normal(kx, (B, C, H, W), dtype=jnp.float32)
    # nn.LayerNorm defaults are ones/zeros; perturb so the affine path is exercised.
    gamma = 1.0 + 0.1 * jax.random.normal(kg, (C,), dtype=jnp.float32)
    beta = 0.1 * jax.random.normal(kb, (C,), dtype=jnp.float32)

    out = jax.block_until_ready(my_layer_norm(x, gamma, beta))
    ref = _reference(x, gamma, beta)
    assert out.shape == (B, C, H, W)
    assert jnp.allclose(out, ref, atol=1e-5, rtol=1e-5), float(jnp.max(jnp.abs(out - ref)))

    # Secondary check: small-S path (7x7 map -> batched images per grid step).
    B2, C2, H2, W2 = 2, 8, 7, 7
    x2 = jax.random.normal(kx, (B2, C2, H2, W2), dtype=jnp.float32)
    g2 = 1.0 + 0.1 * jax.random.normal(kg, (C2,), dtype=jnp.float32)
    b2 = 0.1 * jax.random.normal(kb, (C2,), dtype=jnp.float32)
    out2 = jax.block_until_ready(my_layer_norm(x2, g2, b2))
    ref2 = _reference(x2, g2, b2)
    assert jnp.allclose(out2, ref2, atol=1e-5, rtol=1e-5), float(jnp.max(jnp.abs(out2 - ref2)))

    print("KERNEL_OK")
</pallas_src>

<mosaic_0001>
module attributes {stable_mosaic.version = 11 : i64} {
  func.func @_layernorm_kernel(%arg0: i32, %arg1: i32, %arg2: memref<1x4x128xf32, #tpu.memory_space<vmem>>, %arg3: memref<1x4x1xf32, #tpu.memory_space<vmem>>, %arg4: memref<1x4x1xf32, #tpu.memory_space<vmem>>, %arg5: memref<1x4x128xf32, #tpu.memory_space<vmem>>) attributes {dimension_semantics = [#tpu.dimension_semantics<parallel>, #tpu.dimension_semantics<parallel>], iteration_bounds = array<i64: 2, 2>, scalar_prefetch = 0 : i64, scratch_operands = 0 : i64, tpu.core_type = #tpu.core_type<tc>, window_params = [{transform_indices = @transform_0, window_bounds = array<i64: 1, 4, 128>}, {pipeline_mode = #tpu.pipeline_mode<synchronous>, transform_indices = @transform_1, window_bounds = array<i64: 1, 4, 1>}, {pipeline_mode = #tpu.pipeline_mode<synchronous>, transform_indices = @transform_2, window_bounds = array<i64: 1, 4, 1>}, {transform_indices = @transform_3, window_bounds = array<i64: 1, 4, 128>}]} {
    %c0 = arith.constant 0 : index
    %c0_0 = arith.constant 0 : index
    %c0_1 = arith.constant 0 : index
    %0 = vector.load %arg2[%c0, %c0_0, %c0_1] : memref<1x4x128xf32, #tpu.memory_space<vmem>>, vector<1x4x128xf32>
    %cst = arith.constant dense<0.000000e+00> : vector<1x128xf32>
    %1 = vector.multi_reduction <add>, %0, %cst [1] : vector<1x4x128xf32> to vector<1x128xf32>
    %2 = vector.shape_cast %1 : vector<1x128xf32> to vector<1x1x128xf32>
    %cst_2 = arith.constant 4.000000e+00 : f32
    %3 = vector.broadcast %cst_2 : f32 to vector<1x1x128xf32>
    %4 = arith.divf %2, %3 : vector<1x1x128xf32>
    %5 = arith.mulf %0, %0 : vector<1x4x128xf32>
    %cst_3 = arith.constant dense<0.000000e+00> : vector<1x128xf32>
    %6 = vector.multi_reduction <add>, %5, %cst_3 [1] : vector<1x4x128xf32> to vector<1x128xf32>
    %7 = vector.shape_cast %6 : vector<1x128xf32> to vector<1x1x128xf32>
    %cst_4 = arith.constant 4.000000e+00 : f32
    %8 = vector.broadcast %cst_4 : f32 to vector<1x1x128xf32>
    %9 = arith.divf %7, %8 : vector<1x1x128xf32>
    %10 = arith.mulf %4, %4 : vector<1x1x128xf32>
    %11 = arith.subf %9, %10 : vector<1x1x128xf32>
    %cst_5 = arith.constant 0.000000e+00 : f32
    %12 = vector.broadcast %cst_5 : f32 to vector<1x1x128xf32>
    %13 = arith.maximumf %11, %12 : vector<1x1x128xf32>
    %cst_6 = arith.constant 9.99999974E-6 : f32
    %14 = vector.broadcast %cst_6 : f32 to vector<1x1x128xf32>
    %15 = arith.addf %13, %14 : vector<1x1x128xf32>
    %16 = math.rsqrt %15 : vector<1x1x128xf32>
    %17 = vector.broadcast %4 : vector<1x1x128xf32> to vector<1x4x128xf32>
    %18 = arith.subf %0, %17 : vector<1x4x128xf32>
    %19 = vector.broadcast %16 : vector<1x1x128xf32> to vector<1x4x128xf32>
    %20 = arith.mulf %18, %19 : vector<1x4x128xf32>
    %c0_7 = arith.constant 0 : index
    %c0_8 = arith.constant 0 : index
    %c0_9 = arith.constant 0 : index
    %21 = vector.load %arg3[%c0_7, %c0_8, %c0_9] : memref<1x4x1xf32, #tpu.memory_space<vmem>>, vector<1x4x1xf32>
    %22 = vector.broadcast %21 : vector<1x4x1xf32> to vector<1x4x128xf32>
    %23 = arith.mulf %20, %22 : vector<1x4x128xf32>
    %c0_10 = arith.constant 0 : index
    %c0_11 = arith.constant 0 : index
    %c0_12 = arith.constant 0 : index
    %24 = vector.load %arg4[%c0_10, %c0_11, %c0_12] : memref<1x4x1xf32, #tpu.memory_space<vmem>>, vector<1x4x1xf32>
    %25 = vector.broadcast %24 : vector<1x4x1xf32> to vector<1x4x128xf32>
    %26 = arith.addf %23, %25 : vector<1x4x128xf32>
    %c0_13 = arith.constant 0 : index
    %c0_14 = arith.constant 0 : index
    %c0_15 = arith.constant 0 : index
    %27 = vector.load %arg5[%c0_13, %c0_14, %c0_15] : memref<1x4x128xf32, #tpu.memory_space<vmem>>, vector<1x4x128xf32>
    tpu.vector_store %arg5[%c0_13, %c0_14, %c0_15], %26 {strides = array<i32>} : memref<1x4x128xf32, #tpu.memory_space<vmem>>, vector<1x4x128xf32>,
    return
  }
  func.func @transform_0(%arg0: i32, %arg1: i32) -> (i32, i32, i32) {
    %c0_i32 = arith.constant 0 : i32
    %c0_i32_0 = arith.constant 0 : i32
    return %arg0, %c0_i32, %arg1 : i32, i32, i32
  }
  func.func @transform_1(%arg0: i32, %arg1: i32) -> (i32, i32, i32) {
    %c0_i32 = arith.constant 0 : i32
    %c0_i32_0 = arith.constant 0 : i32
    %c0_i32_1 = arith.constant 0 : i32
    %c0_i32_2 = arith.constant 0 : i32
    return %c0_i32, %c0_i32_0, %c0_i32_1 : i32, i32, i32
  }
  func.func @transform_2(%arg0: i32, %arg1: i32) -> (i32, i32, i32) {
    %c0_i32 = arith.constant 0 : i32
    %c0_i32_0 = arith.constant 0 : i32
    %c0_i32_1 = arith.constant 0 : i32
    %c0_i32_2 = arith.constant 0 : i32
    return %c0_i32, %c0_i32_0, %c0_i32_1 : i32, i32, i32
  }
  func.func @transform_3(%arg0: i32, %arg1: i32) -> (i32, i32, i32) {
    %c0_i32 = arith.constant 0 : i32
    %c0_i32_0 = arith.constant 0 : i32
    return %arg0, %c0_i32, %arg1 : i32, i32, i32
  }
}

</mosaic_0001>

<llo_original>
// kernel: _my_layer_norm_impl.1
$region0: #{_my_layer_norm_impl.1}
  #allocation0 [shape = 'u32[]', space=smem, size = 0x4, offset = 0x4, fixed_abs, tag = 'smem constant byte address 0x4 - core index']
  #allocation1 [shape = 'u32[144,128]{1,0:T(1,128)}', space=vmem, size = 0x12000, scoped, tag = 'internal scratch']
  %s0 = inlined_call_operand.vmem [shape: f32[2,4,256], index: 0, kind: input, shape index: {}]
  %s1 = inlined_call_operand.vmem [shape: f32[1,4,1], index: 1, kind: input, shape index: {}]
  %s2 = inlined_call_operand.vmem [shape: f32[1,4,1], index: 2, kind: input, shape index: {}]
  %s3 = inlined_call_operand.vmem [shape: f32[2,4,256], index: 3, kind: output, shape index: {}]
  %s4 = sld [smem:[#allocation0]]
  $region45: #{_my_layer_norm_impl.1} parent=0
    _
  %s6 = ssub.s32 1, %s4
  %s7 = scalar_select 0, %s6, %s4
  loop: start=0, step=1, limit=6
  $region2: #{_my_layer_norm_impl.1} parent=0 // loop_pre_header
    _
  $region3: #{_my_layer_norm_impl.1} parent=0 // loop_header
    %s9 = sphi 0, %s13
    %p10 = scmp.ge.s32.totalorder %s9, 6
    %s16 = sphi 0, %s28
    %s17 = sphi 0, %s24
    %s18 = sphi 0, %s16
    %s19 = sphi 0, %s17
    %s20 = sphi 0, %s18
    %s21 = sphi 0, %s19
    %s33 = sphi 0, %s35
    %s36 = sphi 0, %s33
    %s37 = sphi 0, %s36
    %s53 = sphi 0, %s37
    %s57 = sphi 0, %s57
    %s59 = sphi 0, %s57
    %s60 = sphi 0, %s59
    %s74 = sphi 0, %s60
    %s78 = sphi 0, %s78
    %s80 = sphi 0, %s78
    %s81 = sphi 0, %s80
    %s95 = sphi 0, %s81
    %s103 = sphi 0, %s105
    %s106 = sphi 0, %s103
    %s107 = sphi 0, %s106
    %s123 = sphi 0, %s107
  $region4: #{_my_layer_norm_impl.1} parent=0 // loop_header_branch
    %12 = sbr.rel (%p10) target = $region8
  $region5: #{_my_layer_norm_impl.1} parent=0 // loop_body
    %s14 = ssub.s32 %s9, 1
    %s15 = ssub.s32 %s9, 2
    %s22 = sadd.s32 1, %s17
    %p23 = scmp.ge.s32.totalorder %s22, 2
    %s24 = scalar_select %p23, 0, %s22
    %s25 = sadd.s32 1, %s16
    %s26 = scalar_select %p23, %s25, %s16
    %p27 = scmp.ge.s32.totalorder %s26, 2
    %s28 = scalar_select %p27, 0, %s26
    %s29 = ssub.s32 %s16, %s28
    %s30 = ssub.s32 %s17, %s24
    %s31 = sor.u32 %s29, %s30
    %p32 = scmp.eq.s32.totalorder %s31, 0
    %s34 = sadd.s32 %s33, 1
    %s35 = scalar_select %p32, %s33, %s34
    %p38 = pneg %p32
    %p39 = scmp.eq.s32.totalorder %s9, 3
    %p40 = por %p38, %p39
    %p41 = scmp.ne.s32.totalorder %s33, %s36
    %p42 = scmp.eq.s32.totalorder %s9, 0
    %p43 = por %p41, %p42
    %p44 = scmp.ne.s32.totalorder %s33, %s36
    %p45 = scmp.eq.s32.totalorder %s14, 3
    %p46 = por %p44, %p45
    %p47 = scmp.ne.s32.totalorder %s36, %s37
    %p48 = scmp.eq.s32.totalorder %s14, 0
    %p49 = por %p47, %p48
    %p50 = scmp.ne.s32.totalorder %s36, %s37
    %p51 = scmp.eq.s32.totalorder %s15, 3
    %p52 = por %p50, %p51
    %p54 = scmp.ne.s32.totalorder %s37, %s53
    %p55 = scmp.eq.s32.totalorder %s15, 0
    %p56 = por %p54, %p55
    %s58 = sadd.s32 %s57, 1
    %p61 = scmp.eq.s32.totalorder %s9, 3
    %p62 = scmp.ne.s32.totalorder %s57, %s59
    %p63 = scmp.eq.s32.totalorder %s9, 0
    %p64 = por %p62, %p63
    %p65 = scmp.ne.s32.totalorder %s57, %s59
    %p66 = scmp.eq.s32.totalorder %s14, 3
    %p67 = por %p65, %p66
    %p68 = scmp.ne.s32.totalorder %s59, %s60
    %p69 = scmp.eq.s32.totalorder %s14, 0
    %p70 = por %p68, %p69
    %p71 = scmp.ne.s32.totalorder %s59, %s60
    %p72 = scmp.eq.s32.totalorder %s15, 3
    %p73 = por %p71, %p72
    %p75 = scmp.ne.s32.totalorder %s60, %s74
    %p76 = scmp.eq.s32.totalorder %s15, 0
    %p77 = por %p75, %p76
    %s79 = sadd.s32 %s78, 1
    %p82 = scmp.eq.s32.totalorder %s9, 3
    %p83 = scmp.ne.s32.totalorder %s78, %s80
    %p84 = scmp.eq.s32.totalorder %s9, 0
    %p85 = por %p83, %p84
    %p86 = scmp.ne.s32.totalorder %s78, %s80
    %p87 = scmp.eq.s32.totalorder %s14, 3
    %p88 = por %p86, %p87
    %p89 = scmp.ne.s32.totalorder %s80, %s81
    %p90 = scmp.eq.s32.totalorder %s14, 0
    %p91 = por %p89, %p90
    %p92 = scmp.ne.s32.totalorder %s80, %s81
    %p93 = scmp.eq.s32.totalorder %s15, 3
    %p94 = por %p92, %p93
    %p96 = scmp.ne.s32.totalorder %s81, %s95
    %p97 = scmp.eq.s32.totalorder %s15, 0
    %p98 = por %p96, %p97
    %s99 = ssub.s32 %s16, %s28
    %s100 = ssub.s32 %s17, %s24
    %s101 = sor.u32 %s99, %s100
    %p102 = scmp.eq.s32.totalorder %s101, 0
    %s104 = sadd.s32 %s103, 1
    %s105 = scalar_select %p102, %s103, %s104
    %p108 = pneg %p102
    %p109 = scmp.eq.s32.totalorder %s9, 3
    %p110 = por %p108, %p109
    %p111 = scmp.ne.s32.totalorder %s103, %s106
    %p112 = scmp.eq.s32.totalorder %s9, 0
    %p113 = por %p111, %p112
    %p114 = scmp.ne.s32.totalorder %s103, %s106
    %p115 = scmp.eq.s32.totalorder %s14, 3
    %p116 = por %p114, %p115
    %p117 = scmp.ne.s32.totalorder %s106, %s107
    %p118 = scmp.eq.s32.totalorder %s14, 0
    %p119 = por %p117, %p118
    %p120 = scmp.ne.s32.totalorder %s106, %s107
    %p121 = scmp.eq.s32.totalorder %s15, 3
    %p122 = por %p120, %p121
    %p124 = scmp.ne.s32.totalorder %s107, %s123
    %p125 = scmp.eq.s32.totalorder %s15, 0
    %p126 = por %p124, %p125
    %p127 = scmp.le.s32.totalorder 1, %s9
    %p128 = scmp.lt.s32.totalorder %s9, 5
    %p129 = pnand %p127, %p128
    %p130 = pneg %p129
    // Predicated region
    $region9: #{_my_layer_norm_impl.1} parent=5 // pred_check
      _
    $region10: #{_my_layer_norm_impl.1} parent=5 // pred_check_branch
      %132 = sbr.rel (%p129) target = $region12
    $region11: #{_my_layer_norm_impl.1} parent=5 // pred_region
      %s133 = ssub.s32 %s9, 1
      // Predicated region
      $region13: #{_my_layer_norm_impl.1} parent=11 // pred_check
        %p134 = pneg %p70
      $region14: #{_my_layer_norm_impl.1} parent=11 // pred_check_branch
        %136 = sbr.rel (%p134) target = $region16
      $region15: #{_my_layer_norm_impl.1} parent=11 // pred_region
        _
      $region16: #{_my_layer_norm_impl.1} parent=11 // pred_fallthru
        _
      // Predicated region
      $region17: #{_my_layer_norm_impl.1} parent=11 // pred_check
        %p137 = pneg %p91
      $region18: #{_my_layer_norm_impl.1} parent=11 // pred_check_branch
        %139 = sbr.rel (%p137) target = $region20
      $region19: #{_my_layer_norm_impl.1} parent=11 // pred_region
        _
      $region20: #{_my_layer_norm_impl.1} parent=11 // pred_fallthru
        _
    $region12: #{_my_layer_norm_impl.1} parent=5 // pred_fallthru
      _
    %p140 = scmp.lt.s32.totalorder %s9, 4
    // Predicated region
    $region21: #{_my_layer_norm_impl.1} parent=5 // pred_check
      %p141 = pneg %p140
    $region22: #{_my_layer_norm_impl.1} parent=5 // pred_check_branch
      %143 = sbr.rel (%p141) target = $region24
    $region23: #{_my_layer_norm_impl.1} parent=5 // pred_region
      // Predicated region
      $region25: #{_my_layer_norm_impl.1} parent=23 // pred_check
        %p144 = pneg %p43
      $region26: #{_my_layer_norm_impl.1} parent=23 // pred_check_branch
        %146 = sbr.rel (%p144) target = $region28
      $region27: #{_my_layer_norm_impl.1} parent=23 // pred_region
        %p147 = scmp.lt.s32.totalorder %s16, 1
        %s148 = scalar_select %p147, %s16, 1
        %p149 = scmp.lt.s32.totalorder %s17, 1
        %s150 = scalar_select %p149, %s17, 1
        %s151 = smul.addr %s148, 2
        %s152 = sadd.s32 %s150, %s151
        %s153 = smul.addr %s152, 4
        %s154 = scalar_lea.vmem %s0, %s153
      $region28: #{_my_layer_norm_impl.1} parent=23 // pred_fallthru
        _
    $region24: #{_my_layer_norm_impl.1} parent=5 // pred_fallthru
      _
    %p155 = scmp.le.s32.totalorder 1, %s9
    %p156 = scmp.lt.s32.totalorder %s9, 5
    %p157 = pnand %p155, %p156
    %p158 = pneg %p157
    // Predicated region
    $region29: #{_my_layer_norm_impl.1} parent=5 // pred_check
      _
    $region30: #{_my_layer_norm_impl.1} parent=5 // pred_check_branch
      %160 = sbr.rel (%p157) target = $region32
    $region31: #{_my_layer_norm_impl.1} parent=5 // pred_region
      %s161 = ssub.s32 %s9, 1
      %p162 = scmp.lt.s32.totalorder %s18, 1
      %s163 = scalar_select %p162, %s18, 1
      %p164 = scmp.lt.s32.totalorder %s19, 1
      %s165 = scalar_select %p164, %s19, 1
      %s166 = smul.addr %s163, 2
      %s167 = sadd.s32 %s165, %s166
      %s168 = smul.addr %s167, 4
      %s169 = scalar_lea.vmem %s0, %s168
      %p170 = pneg %p49
      %p171 = pneg %p46
      %p172 = pneg %p70
      %p173 = pneg %p67
      %p174 = pneg %p91
      %p175 = pneg %p88
      %p176 = pneg %p119
      %p177 = pneg %p116
      %p178 = scmp.lt.s32.totalorder %s18, 1
      %s179 = scalar_select %p178, %s18, 1
      %p180 = scmp.lt.s32.totalorder %s19, 1
      %s181 = scalar_select %p180, %s19, 1
      %s182 = smul.addr %s179, 2
      %s183 = sadd.s32 %s181, %s182
      %s184 = smul.addr %s183, 4
      %s185 = scalar_lea.vmem %s3, %s184
      %p186 = scmp.lt.s32.totalorder %s18, 1
      %s187 = scalar_select %p186, %s18, 1
      %p188 = scmp.lt.s32.totalorder %s19, 1
      %s189 = scalar_select %p188, %s19, 1
      %s190 = smul.addr %s187, 2
      %s191 = sadd.s32 %s189, %s190
      %s192 = smul.addr %s191, 4
      %s193 = scalar_lea.vmem %s0, %s192
      %p194 = scmp.lt.s32.totalorder %s18, 1
      %s195 = scalar_select %p194, %s18, 1
      %p196 = scmp.lt.s32.totalorder %s19, 1
      %s197 = scalar_select %p196, %s19, 1
      %s198 = smul.addr %s195, 2
      %s199 = sadd.s32 %s197, %s198
      %s200 = smul.addr %s199, 4
      %s201 = scalar_lea.vmem %s3, %s200
      %v202 = vld [vmem:[%s193] sm:$0xf]
      %vm203 = vcmask 1043456
      %v204 = vsel %vm203, %v202, 0.0
      %v205 = vrot.slane %v204, 4
      %v206 = vadd.f32 %v204, %v205
      %v207 = vrot.slane %v206, 2
      %v208 = vadd.f32 %v206, %v207
      %v209 = vrot.slane %v208, 1
      %v210 = vadd.f32 %v208, %v209
      %v211 = vrcp.pop 4.0
      %v212 = vmul.f32 %v210, %v211
      %v213 = vmul.f32 %v202, %v202
      %v214 = vsel %vm203, %v213, 0.0
      %v215 = vrot.slane %v214, 4
      %v216 = vadd.f32 %v214, %v215
      %v217 = vrot.slane %v216, 2
      %v218 = vadd.f32 %v216, %v217
      %v219 = vrot.slane %v218, 1
      %v220 = vadd.f32 %v218, %v219
      %v221 = vmul.f32 %v220, %v211
      %v222 = vmul.f32 %v212, %v212
      %v223 = vsub.f32 %v221, %v222
      %v224 = vmax.f32 %v223, 0.0
      %v225 = vadd.f32 %v224, 1e-05
      %v226 = vrsqrt.pop %v225
      %v227 = vsub.f32 %v202, %v212
      %v228 = vmul.f32 %v227, %v226
      %v229 = vld [vmem:[%s1] sm:$0xf]
      %231 = vset.pattern.permute.xlu0 0
      %232 = vperm.xlu0 %231, %v229
      %v233 = vpop.permute.xlu0 %232
      %v235 = vmul.f32 %v228, %v233
      %v236 = vld [vmem:[%s2] sm:$0xf]
      %238 = vset.pattern.permute.xlu0 0
      %239 = vperm.xlu0 %238, %v236
      %v240 = vpop.permute.xlu0 %239
      %v242 = vadd.f32 %v235, %v240
      %243 = vst [vmem:[%s201] sm:$0xf] %v242
      %p244 = scmp.lt.s32.totalorder %s18, 1
      %s245 = scalar_select %p244, %s18, 1
      %p246 = scmp.lt.s32.totalorder %s19, 1
      %s247 = scalar_select %p246, %s19, 1
      %s248 = smul.addr %s245, 2
      %s249 = sadd.s32 %s247, %s248
      %s250 = smul.addr %s249, 4
      %s251 = scalar_lea.vmem %s3, %s250
      // Predicated region
      $region33: #{_my_layer_norm_impl.1} parent=31 // pred_check
        %p252 = pneg %p116
      $region34: #{_my_layer_norm_impl.1} parent=31 // pred_check_branch
        %254 = sbr.rel (%p252) target = $region36
      $region35: #{_my_layer_norm_impl.1} parent=31 // pred_region
        _
      $region36: #{_my_layer_norm_impl.1} parent=31 // pred_fallthru
        _
    $region32: #{_my_layer_norm_impl.1} parent=5 // pred_fallthru
      _
    %p255 = scmp.le.s32.totalorder 2, %s9
    // Predicated region
    $region37: #{_my_layer_norm_impl.1} parent=5 // pred_check
      %p256 = pneg %p255
    $region38: #{_my_layer_norm_impl.1} parent=5 // pred_check_branch
      %258 = sbr.rel (%p256) target = $region40
    $region39: #{_my_layer_norm_impl.1} parent=5 // pred_region
      %s259 = ssub.s32 %s9, 2
      // Predicated region
      $region41: #{_my_layer_norm_impl.1} parent=39 // pred_check
        %p260 = pneg %p122
      $region42: #{_my_layer_norm_impl.1} parent=39 // pred_check_branch
        %262 = sbr.rel (%p260) target = $region44
      $region43: #{_my_layer_norm_impl.1} parent=39 // pred_region
        %p263 = scmp.lt.s32.totalorder %s20, 1
        %s264 = scalar_select %p263, %s20, 1
        %p265 = scmp.lt.s32.totalorder %s21, 1
        %s266 = scalar_select %p265, %s21, 1
        %s267 = smul.addr %s264, 2
        %s268 = sadd.s32 %s266, %s267
        %s269 = smul.addr %s268, 4
        %s270 = scalar_lea.vmem %s3, %s269
      $region44: #{_my_layer_norm_impl.1} parent=39 // pred_fallthru
        _
    $region40: #{_my_layer_norm_impl.1} parent=5 // pred_fallthru
      _
  $region6: #{_my_layer_norm_impl.1} parent=0 // loop_footer
    %s13 = sadd.s32 1, %s9
  $region7: #{_my_layer_norm_impl.1} parent=0 // loop_footer_branch
    %8 = sbr.rel target = $region3
  $region8: #{_my_layer_norm_impl.1} parent=0 // loop_exit
    _

</llo_original>
